<compile_context>
chip_gen: v7x
topology: tpu7x:2x2x1
jax: 0.10.0
libtpu: 0.0.40
codegen_flags: <defaults>
</compile_context>

<pallas_src>
import functools

import jax
import jax.numpy as jnp
from jax.experimental import pallas as pl
from jax.experimental.pallas import tpu as pltpu

_LANE = 128                      # lane width: pad E and the item axis to this
_NODE_TILE = 256                 # row / K tile for propagation (>=512 for big graphs)
_BATCH_TILE = 8                  # batch tile for the score kernel
_VMEM_LIMIT = 64 * 1024 * 1024   # explicit scoped-VMEM cap, safe on all gens


def _round_up(x, m):
    return ((x + m - 1) // m) * m


# ---------------------------------------------------------------------------
# Kernel 1: one LightGCN propagation layer (tiled matmul + fused mean epilogue)
#
#   cur_out = graph @ cur                     (bf16 MXU, f32 accumulation)
#   acc_out = (acc_in + cur_out) * scale      (scale = 1/(L+1) on last layer)
# ---------------------------------------------------------------------------
def _prop_layer_kernel(scale, g_ref, e_ref, accin_ref,
                       cur_out_ref, acc_out_ref, acc_sc):
    k = pl.program_id(1)

    @pl.when(k == 0)
    def _():
        acc_sc[...] = jnp.zeros_like(acc_sc)

    acc_sc[...] += jnp.dot(
        g_ref[...],                               # (tm, tk) bf16
        e_ref[...].astype(jnp.bfloat16),          # (tk, E)  bf16
        preferred_element_type=jnp.float32)

    @pl.when(k == pl.num_programs(1) - 1)
    def _():
        nxt = acc_sc[...]
        cur_out_ref[...] = nxt.astype(cur_out_ref.dtype)
        acc_out_ref[...] = ((accin_ref[...] + nxt) * scale).astype(
            acc_out_ref.dtype)


def _propagate_layer(graph, cur, acc_in, scale, *, tm, tk):
    N, _ = graph.shape
    _, E = cur.shape
    grid = (N // tm, N // tk)

    flops = 2 * N * N * E
    bytes_accessed = int(
        N * N * graph.dtype.itemsize          # graph read once
        + (N // tm) * N * E * 4               # cur re-read per row tile
        + 3 * N * E * 4)                      # acc_in read + 2 outputs written

    return pl.pallas_call(
        functools.partial(_prop_layer_kernel, scale),
        out_shape=(jax.ShapeDtypeStruct((N, E), jnp.float32),
                   jax.ShapeDtypeStruct((N, E), jnp.float32)),
        grid_spec=pltpu.PrefetchScalarGridSpec(
            num_scalar_prefetch=0,
            grid=grid,
            in_specs=[
                pl.BlockSpec((tm, tk), lambda i, k: (i, k)),   # graph tile
                pl.BlockSpec((tk, E), lambda i, k: (k, 0)),    # cur K-slab
                pl.BlockSpec((tm, E), lambda i, k: (i, 0)),    # running sum in
            ],
            out_specs=(
                pl.BlockSpec((tm, E), lambda i, k: (i, 0)),    # layer output
                pl.BlockSpec((tm, E), lambda i, k: (i, 0)),    # running sum out
            ),
            scratch_shapes=[pltpu.VMEM((tm, E), jnp.float32)]),
        compiler_params=pltpu.CompilerParams(
            dimension_semantics=("parallel", "arbitrary"),
            vmem_limit_bytes=_VMEM_LIMIT),
        cost_estimate=pl.CostEstimate(
            flops=flops, transcendentals=0, bytes_accessed=bytes_accessed),
    )(graph, cur, acc_in)


def lightgcn_propagate(graph, all_emb, num_layers, *, tm=_NODE_TILE,
                       tk=_NODE_TILE):
    """Returns mean of [all_emb, G@all_emb, ..., G^L@all_emb] (padded shapes)."""
    if num_layers == 0:
        return all_emb
    cur = all_emb
    acc = all_emb
    inv_mean = 1.0 / float(num_layers + 1)
    for layer in range(num_layers):
        scale = inv_mean if layer == num_layers - 1 else 1.0
        cur, acc = _propagate_layer(graph, cur, acc, scale, tm=tm, tk=tk)
    return acc


# ---------------------------------------------------------------------------
# Kernel 2: scoring  logits[b, 0, i] = sum_e users_emb[b, 0, e] * items[b, i, e]
#           (MXU contraction, lane-dense (B, 1, I_pad) output, tiled over B)
# ---------------------------------------------------------------------------
def _score_kernel(u_ref, it_ref, o_ref):
    u = u_ref[...].astype(jnp.bfloat16)       # (TB, 1, E)
    it = it_ref[...].astype(jnp.bfloat16)     # (TB, I, E)
    s = jnp.einsum('bqe,bke->bqk', u, it,
                   preferred_element_type=jnp.float32)   # (TB, 1, I)
    o_ref[...] = s.astype(o_ref.dtype)


def lightgcn_score(users_emb, items_emb, *, tb=_BATCH_TILE):
    """users_emb: (B, E), items_emb: (B, I, E); E, I already lane-padded."""
    B, E = users_emb.shape
    _, I, _ = items_emb.shape
    B_pad = _round_up(B, tb)
    if B_pad != B:
        users_emb = jnp.pad(users_emb, ((0, B_pad - B), (0, 0)))
        items_emb = jnp.pad(items_emb, ((0, B_pad - B), (0, 0), (0, 0)))
    u3 = users_emb[:, None, :]                # (B_pad, 1, E)

    out = pl.pallas_call(
        _score_kernel,
        out_shape=jax.ShapeDtypeStruct((B_pad, 1, I), jnp.float32),
        grid_spec=pltpu.PrefetchScalarGridSpec(
            num_scalar_prefetch=0,
            grid=(B_pad // tb,),
            in_specs=[
                pl.BlockSpec((tb, 1, E), lambda b: (b, 0, 0)),
                pl.BlockSpec((tb, I, E), lambda b: (b, 0, 0)),
            ],
            out_specs=pl.BlockSpec((tb, 1, I), lambda b: (b, 0, 0))),
        compiler_params=pltpu.CompilerParams(
            dimension_semantics=("parallel",),
            vmem_limit_bytes=_VMEM_LIMIT),
    )(u3, items_emb)
    return out[:B]                            # (B, 1, I_pad)


# ---------------------------------------------------------------------------
# LightGCN module (parameters initialized deterministically in-script)
# ---------------------------------------------------------------------------
class LightGCNPallas:
    def __init__(self, num_users, num_items, emb_size, num_layers, graph, key,
                 *, node_tile=_NODE_TILE):
        self.num_layers = num_layers
        self.emb_size = emb_size
        self.n_users = num_users + 1
        self.n_items = num_items + 1
        self.N = self.n_users + self.n_items
        self.node_tile = node_tile
        self.N_pad = _round_up(self.N, node_tile)
        self.E_pad = _round_up(emb_size, _LANE)

        k_u, k_i = jax.random.split(key)
        # torch.nn.Embedding default init ~ N(0, 1)
        self.user_emb = jax.random.normal(
            k_u, (self.n_users, emb_size), dtype=jnp.float32)
        self.item_emb = jax.random.normal(
            k_i, (self.n_items, emb_size), dtype=jnp.float32)

        # Lane/node padded copies used by the kernels.
        all_emb = jnp.concatenate([self.user_emb, self.item_emb], axis=0)
        self.all_emb_padded = jnp.zeros(
            (self.N_pad, self.E_pad), jnp.float32
        ).at[:self.N, :emb_size].set(all_emb)

        # bf16 graph: halves HBM traffic on the dominant operand; accumulation
        # on the MXU stays f32 inside the kernel.
        # TODO(synk): real LightGCN graphs are sparse (torch.sparse.mm); a
        # block-sparse PrefetchScalarGridSpec that skips all-zero graph tiles
        # would cut flops/bytes by 10-100x vs this dense stand-in.
        g = jnp.zeros((self.N_pad, self.N_pad), jnp.float32)
        g = g.at[:self.N, :self.N].set(graph.astype(jnp.float32))
        self.graph = g.astype(jnp.bfloat16)

    def _propagate_padded(self):
        return lightgcn_propagate(self.graph, self.all_emb_padded,
                                  self.num_layers,
                                  tm=self.node_tile, tk=self.node_tile)

    def computer(self):
        light = self._propagate_padded()
        users = light[:self.n_users, :self.emb_size]
        items = light[self.n_users:self.N, :self.emb_size]
        return users, items

    def forward(self, users, items):
        items = jnp.squeeze(items)                      # (B, I)
        light = self._propagate_padded()                # (N_pad, E_pad) f32
        all_users = light[:self.n_users]                # (n_users, E_pad)
        all_items = light[self.n_users:self.N]          # (n_items, E_pad)

        users_emb = all_users[users]                    # (B, E_pad)  gather (glue)
        B, I = items.shape
        I_pad = _round_up(I, _LANE)
        # Pad item indices so the score output's lane axis is 128-dense.
        items_idx = jnp.zeros((B, I_pad), dtype=items.dtype).at[:, :I].set(items)
        items_emb = all_items[items_idx]                # (B, I_pad, E_pad)

        logits = lightgcn_score(users_emb, items_emb)   # (B, 1, I_pad)
        return logits[:, :, :I]                         # (B, 1, I)


# ---------------------------------------------------------------------------
# Pure-JAX reference (matches the PyTorch forward semantics; mimics the
# kernels' bf16 input rounding so tolerances stay tight)
# ---------------------------------------------------------------------------
def reference_forward(model, users, items):
    items = jnp.squeeze(items)
    N = model.N
    g = model.graph[:N, :N].astype(jnp.float32)     # same bf16-rounded graph
    all_emb = jnp.concatenate([model.user_emb, model.item_emb], axis=0)
    embs = [all_emb]
    cur = all_emb
    for _ in range(model.num_layers):
        cur = g @ cur.astype(jnp.bfloat16).astype(jnp.float32)
        embs.append(cur)
    light_out = jnp.mean(jnp.stack(embs, axis=1), axis=1)
    all_users = light_out[:model.n_users]
    all_items = light_out[model.n_users:]
    users_emb = all_users[users][:, None, :].repeat(items.shape[1], axis=1)
    items_emb = all_items[items]
    u_bf = users_emb.astype(jnp.bfloat16).astype(jnp.float32)
    it_bf = items_emb.astype(jnp.bfloat16).astype(jnp.float32)
    logits = jnp.sum(u_bf * it_bf, axis=-1)[:, None, :]
    return logits


if __name__ == "__main__":
    # Small, deterministic configuration (exercises tiling + padding paths).
    num_users, num_items = 255, 255        # tables: 256 + 256 rows -> N = 512
    emb_size = 64                          # padded to 128 lanes internally
    num_layers = 2
    batch, items_per_user = 8, 16

    key = jax.random.PRNGKey(0)
    k_graph, k_model, k_users, k_items = jax.random.split(key, 4)

    n_nodes = (num_users + 1) + (num_items + 1)
    # Deterministic dense "normalized adjacency": sparse-ish mask + self loops,
    # row-normalized (dense stand-in for torch.sparse).
    raw = jax.random.uniform(k_graph, (n_nodes, n_nodes), dtype=jnp.float32)
    adj = (raw > 0.97).astype(jnp.float32) + jnp.eye(n_nodes, dtype=jnp.float32)
    graph = adj / jnp.sum(adj, axis=1, keepdims=True)

    model = LightGCNPallas(num_users, num_items, emb_size, num_layers,
                           graph, k_model)

    users = jax.random.randint(k_users, (batch,), 0, num_users + 1,
                               dtype=jnp.int32)
    items = jax.random.randint(k_items, (batch, 1, items_per_user), 0,
                               num_items + 1, dtype=jnp.int32)

    logits = model.forward(users, items)
    logits = jax.block_until_ready(logits)

    ref = reference_forward(model, users, items)
    assert logits.shape == (batch, 1, items_per_user), logits.shape
    err = jnp.max(jnp.abs(logits - ref))
    assert jnp.allclose(logits, ref, atol=1e-2, rtol=1e-2), err

    print("KERNEL_OK")
</pallas_src>

<mosaic_0001>
module attributes {stable_mosaic.version = 11 : i64} {
  func.func @_prop_layer_kernel(%arg0: i32, %arg1: i32, %arg2: memref<256x256xbf16, #tpu.memory_space<vmem>>, %arg3: memref<256x128xf32, #tpu.memory_space<vmem>>, %arg4: memref<256x128xf32, #tpu.memory_space<vmem>>, %arg5: memref<256x128xf32, #tpu.memory_space<vmem>>, %arg6: memref<256x128xf32, #tpu.memory_space<vmem>>, %arg7: memref<256x128xf32, #tpu.memory_space<vmem>>) attributes {dimension_semantics = [#tpu.dimension_semantics<parallel>, #tpu.dimension_semantics<arbitrary>], iteration_bounds = array<i64: 2, 2>, scalar_prefetch = 0 : i64, scratch_operands = 1 : i64, tpu.core_type = #tpu.core_type<tc>, window_params = [{transform_indices = @transform_0, window_bounds = array<i64: 256, 256>}, {transform_indices = @transform_1, window_bounds = array<i64: 256, 128>}, {transform_indices = @transform_2, window_bounds = array<i64: 256, 128>}, {transform_indices = @transform_3, window_bounds = array<i64: 256, 128>}, {transform_indices = @transform_4, window_bounds = array<i64: 256, 128>}]} {
    %c0_i32 = arith.constant 0 : i32
    %0 = arith.cmpi eq, %arg1, %c0_i32 : i32
    %1 = arith.extui %0 : i1 to i32
    %c0_i32_0 = arith.constant 0 : i32
    %2 = arith.cmpi ne, %1, %c0_i32_0 : i32
    scf.if %2 {
      %cst_9 = arith.constant 0.000000e+00 : f32
      %13 = vector.broadcast %cst_9 : f32 to vector<256x128xf32>
      %c0_10 = arith.constant 0 : index
      %c0_11 = arith.constant 0 : index
      %14 = vector.load %arg7[%c0_10, %c0_11] : memref<256x128xf32, #tpu.memory_space<vmem>>, vector<256x128xf32>
      tpu.vector_store %arg7[%c0_10, %c0_11], %13 {strides = array<i32>} : memref<256x128xf32, #tpu.memory_space<vmem>>, vector<256x128xf32>,
    } else {
    }
    %c0 = arith.constant 0 : index
    %c0_1 = arith.constant 0 : index
    %3 = vector.load %arg7[%c0, %c0_1] : memref<256x128xf32, #tpu.memory_space<vmem>>, vector<256x128xf32>
    %c0_2 = arith.constant 0 : index
    %c0_3 = arith.constant 0 : index
    %4 = vector.load %arg2[%c0_2, %c0_3] : memref<256x256xbf16, #tpu.memory_space<vmem>>, vector<256x256xbf16>
    %c0_4 = arith.constant 0 : index
    %c0_5 = arith.constant 0 : index
    %5 = vector.load %arg3[%c0_4, %c0_5] : memref<256x128xf32, #tpu.memory_space<vmem>>, vector<256x128xf32>
    %6 = arith.truncf %5 : vector<256x128xf32> to vector<256x128xbf16>
    %cst = arith.constant dense<0.000000e+00> : vector<256x128xf32>
    %7 = tpu.matmul %4, %6, %cst {dimension_numbers = #tpu.dot_dimension_numbers<[1], [0], [0], [1], [0, 0, 1, 1], [], []>} : vector<256x256xbf16>, vector<256x128xbf16>, vector<256x128xf32> -> vector<256x128xf32>
    %8 = arith.addf %3, %7 : vector<256x128xf32>
    %c0_6 = arith.constant 0 : index
    %c0_7 = arith.constant 0 : index
    %9 = vector.load %arg7[%c0_6, %c0_7] : memref<256x128xf32, #tpu.memory_space<vmem>>, vector<256x128xf32>
    tpu.vector_store %arg7[%c0_6, %c0_7], %8 {strides = array<i32>} : memref<256x128xf32, #tpu.memory_space<vmem>>, vector<256x128xf32>,
    %c1_i32 = arith.constant 1 : i32
    %10 = arith.cmpi eq, %arg1, %c1_i32 : i32
    %11 = arith.extui %10 : i1 to i32
    %c0_i32_8 = arith.constant 0 : i32
    %12 = arith.cmpi ne, %11, %c0_i32_8 : i32
    scf.if %12 {
      %c0_9 = arith.constant 0 : index
      %c0_10 = arith.constant 0 : index
      %13 = vector.load %arg7[%c0_9, %c0_10] : memref<256x128xf32, #tpu.memory_space<vmem>>, vector<256x128xf32>
      %c0_11 = arith.constant 0 : index
      %c0_12 = arith.constant 0 : index
      %14 = vector.load %arg5[%c0_11, %c0_12] : memref<256x128xf32, #tpu.memory_space<vmem>>, vector<256x128xf32>
      tpu.vector_store %arg5[%c0_11, %c0_12], %13 {strides = array<i32>} : memref<256x128xf32, #tpu.memory_space<vmem>>, vector<256x128xf32>,
      %c0_13 = arith.constant 0 : index
      %c0_14 = arith.constant 0 : index
      %15 = vector.load %arg4[%c0_13, %c0_14] : memref<256x128xf32, #tpu.memory_space<vmem>>, vector<256x128xf32>
      %16 = arith.addf %15, %13 : vector<256x128xf32>
      %cst_15 = arith.constant 1.000000e+00 : f32
      %17 = vector.broadcast %cst_15 : f32 to vector<256x128xf32>
      %18 = arith.mulf %16, %17 : vector<256x128xf32>
      %c0_16 = arith.constant 0 : index
      %c0_17 = arith.constant 0 : index
      %19 = vector.load %arg6[%c0_16, %c0_17] : memref<256x128xf32, #tpu.memory_space<vmem>>, vector<256x128xf32>
      tpu.vector_store %arg6[%c0_16, %c0_17], %18 {strides = array<i32>} : memref<256x128xf32, #tpu.memory_space<vmem>>, vector<256x128xf32>,
    } else {
    }
    return
  }
  func.func @transform_0(%arg0: i32, %arg1: i32) -> (i32, i32) {
    %c0_i32 = arith.constant 0 : i32
    return %arg0, %arg1 : i32, i32
  }
  func.func @transform_1(%arg0: i32, %arg1: i32) -> (i32, i32) {
    %c0_i32 = arith.constant 0 : i32
    %c0_i32_0 = arith.constant 0 : i32
    return %arg1, %c0_i32 : i32, i32
  }
  func.func @transform_2(%arg0: i32, %arg1: i32) -> (i32, i32) {
    %c0_i32 = arith.constant 0 : i32
    %c0_i32_0 = arith.constant 0 : i32
    return %arg0, %c0_i32 : i32, i32
  }
  func.func @transform_3(%arg0: i32, %arg1: i32) -> (i32, i32) {
    %c0_i32 = arith.constant 0 : i32
    %c0_i32_0 = arith.constant 0 : i32
    return %arg0, %c0_i32 : i32, i32
  }
  func.func @transform_4(%arg0: i32, %arg1: i32) -> (i32, i32) {
    %c0_i32 = arith.constant 0 : i32
    %c0_i32_0 = arith.constant 0 : i32
    return %arg0, %c0_i32 : i32, i32
  }
}

</mosaic_0001>

<llo_original>
// kernel: tpu_custom_call.1
$region0: #{tpu_custom_call.1}
  #allocation0 [shape = 'u32[]', space=smem, size = 0x4, offset = 0x4, fixed_abs, tag = 'smem constant byte address 0x4 - core index']
  #allocation1 [shape = 'u32[144,128]{1,0:T(1,128)}', space=vmem, size = 0x12000, scoped, tag = 'internal scratch']
  #allocation2 [shape = 'f32[256,128]{1,0:T(8,128)}', space=vmem, size = 0x20000, scoped, tag = 'scratch operand']
  %s0 = inlined_call_operand.hbm [shape: bf16[512,512], index: 0, kind: input, shape index: {}]
  %s1 = inlined_call_operand.hbm [shape: f32[512,128], index: 1, kind: input, shape index: {}]
  %s2 = inlined_call_operand.hbm [shape: f32[512,128], index: 2, kind: input, shape index: {}]
  %s3 = inlined_call_operand.hbm [shape: f32[512,128], index: 3, kind: output, shape index: {0}]
  %s4 = inlined_call_operand.hbm [shape: f32[512,128], index: 4, kind: output, shape index: {1}]
  %5 = xla_tuple %s3, %s4
  %s6 = sld [smem:[#allocation0]]
  $region73: #{tpu_custom_call.1} parent=0
    _
  %s8 = ssub.s32 1, %s6
  %s9 = scalar_select 0, %s8, %s6
  $region1: #{tpu_custom_call.1} parent=0
    #allocation3 [shape = 'u8[262144]{0}', space=vmem, size = 0x40000, scoped, tag = 'input window, operand 0']
    #allocation4 [shape = 's32[2]{0}', space=sflag, size = 0x8, scoped, tag = 'scoped memory for tpu_custom_call.1']
    #allocation5 [shape = 's32[2]{0}', space=sflag, size = 0x8, scoped, tag = 'scoped memory for tpu_custom_call.1']
    #allocation6 [shape = 'u8[262144]{0}', space=vmem, size = 0x40000, scoped, tag = 'input window, operand 1']
    #allocation7 [shape = 's32[2]{0}', space=sflag, size = 0x8, scoped, tag = 'scoped memory for tpu_custom_call.1']
    #allocation8 [shape = 'u8[262144]{0}', space=vmem, size = 0x40000, scoped, tag = 'input window, operand 2']
    #allocation9 [shape = 'u8[262144]{0}', space=vmem, size = 0x40000, scoped, tag = 'output window, operand 0']
    #allocation10 [shape = 'u8[262144]{0}', space=vmem, size = 0x40000, scoped, tag = 'output window, operand 1']
    #allocation11 [shape = 's32[2]{0}', space=sflag, size = 0x8, scoped, tag = 'scoped memory for tpu_custom_call.1']
    %10 = vsyncpa [#allocation4], 0
    %s11 = scalar_lea.sflag [#allocation4], 1
    %12 = vsyncpa %s11, 0
    %13 = vsyncpa [#allocation7], 0
    %s14 = scalar_lea.sflag [#allocation7], 1
    %15 = vsyncpa %s14, 0
    %16 = vsyncpa [#allocation5], 0
    %s17 = scalar_lea.sflag [#allocation5], 1
    %18 = vsyncpa %s17, 0
    %19 = vsyncpa [#allocation11], 0
    %s20 = scalar_lea.sflag [#allocation11], 1
    %21 = vsyncpa %s20, 0
    loop: start=0, step=1, limit=6
    $region2: #{tpu_custom_call.1} parent=1 // loop_pre_header
      _
    $region3: #{tpu_custom_call.1} parent=1 // loop_header
      %s23 = sphi 0, %s27
      %p24 = scmp.ge.s32.totalorder %s23, 6
      %s30 = sphi 0, %s42
      %s31 = sphi 0, %s38
      %s32 = sphi 0, %s30
      %s33 = sphi 0, %s31
      %s34 = sphi 0, %s32
      %s35 = sphi 0, %s33
      %s47 = sphi 0, %s49
      %s50 = sphi 0, %s47
      %s51 = sphi 0, %s50
      %s67 = sphi 0, %s51
      %s73 = sphi 0, %s75
      %s76 = sphi 0, %s73
      %s77 = sphi 0, %s76
      %s93 = sphi 0, %s77
      %s99 = sphi 0, %s101
      %s102 = sphi 0, %s99
      %s103 = sphi 0, %s102
      %s119 = sphi 0, %s103
      %s125 = sphi 0, %s127
      %s128 = sphi 0, %s125
      %s129 = sphi 0, %s128
      %s145 = sphi 0, %s129
      %s151 = sphi 0, %s153
      %s154 = sphi 0, %s151
      %s155 = sphi 0, %s154
      %s171 = sphi 0, %s155
    $region4: #{tpu_custom_call.1} parent=1 // loop_header_branch
      %26 = sbr.rel (%p24) target = $region8
    $region5: #{tpu_custom_call.1} parent=1 // loop_body
      %s28 = ssub.s32 %s23, 1
      %s29 = ssub.s32 %s23, 2
      %s36 = sadd.s32 1, %s31
      %p37 = scmp.ge.s32.totalorder %s36, 2
      %s38 = scalar_select %p37, 0, %s36
      %s39 = sadd.s32 1, %s30
      %s40 = scalar_select %p37, %s39, %s30
      %p41 = scmp.ge.s32.totalorder %s40, 2
      %s42 = scalar_select %p41, 0, %s40
      %s43 = ssub.s32 %s30, %s42
      %s44 = ssub.s32 %s31, %s38
      %s45 = sor.u32 %s43, %s44
      %p46 = scmp.eq.s32.totalorder %s45, 0
      %s48 = sadd.s32 %s47, 1
      %s49 = scalar_select %p46, %s47, %s48
      %p52 = pneg %p46
      %p53 = scmp.eq.s32.totalorder %s23, 3
      %p54 = por %p52, %p53
      %p55 = scmp.ne.s32.totalorder %s47, %s50
      %p56 = scmp.eq.s32.totalorder %s23, 0
      %p57 = por %p55, %p56
      %p58 = scmp.ne.s32.totalorder %s47, %s50
      %p59 = scmp.eq.s32.totalorder %s28, 3
      %p60 = por %p58, %p59
      %p61 = scmp.ne.s32.totalorder %s50, %s51
      %p62 = scmp.eq.s32.totalorder %s28, 0
      %p63 = por %p61, %p62
      %p64 = scmp.ne.s32.totalorder %s50, %s51
      %p65 = scmp.eq.s32.totalorder %s29, 3
      %p66 = por %p64, %p65
      %p68 = scmp.ne.s32.totalorder %s51, %s67
      %p69 = scmp.eq.s32.totalorder %s29, 0
      %p70 = por %p68, %p69
      %s71 = ssub.s32 %s31, %s38
      %p72 = scmp.eq.s32.totalorder %s71, 0
      %s74 = sadd.s32 %s73, 1
      %s75 = scalar_select %p72, %s73, %s74
      %p78 = pneg %p72
      %p79 = scmp.eq.s32.totalorder %s23, 3
      %p80 = por %p78, %p79
      %p81 = scmp.ne.s32.totalorder %s73, %s76
      %p82 = scmp.eq.s32.totalorder %s23, 0
      %p83 = por %p81, %p82
      %p84 = scmp.ne.s32.totalorder %s73, %s76
      %p85 = scmp.eq.s32.totalorder %s28, 3
      %p86 = por %p84, %p85
      %p87 = scmp.ne.s32.totalorder %s76, %s77
      %p88 = scmp.eq.s32.totalorder %s28, 0
      %p89 = por %p87, %p88
      %p90 = scmp.ne.s32.totalorder %s76, %s77
      %p91 = scmp.eq.s32.totalorder %s29, 3
      %p92 = por %p90, %p91
      %p94 = scmp.ne.s32.totalorder %s77, %s93
      %p95 = scmp.eq.s32.totalorder %s29, 0
      %p96 = por %p94, %p95
      %s97 = ssub.s32 %s30, %s42
      %p98 = scmp.eq.s32.totalorder %s97, 0
      %s100 = sadd.s32 %s99, 1
      %s101 = scalar_select %p98, %s99, %s100
      %p104 = pneg %p98
      %p105 = scmp.eq.s32.totalorder %s23, 3
      %p106 = por %p104, %p105
      %p107 = scmp.ne.s32.totalorder %s99, %s102
      %p108 = scmp.eq.s32.totalorder %s23, 0
      %p109 = por %p107, %p108
      %p110 = scmp.ne.s32.totalorder %s99, %s102
      %p111 = scmp.eq.s32.totalorder %s28, 3
      %p112 = por %p110, %p111
      %p113 = scmp.ne.s32.totalorder %s102, %s103
      %p114 = scmp.eq.s32.totalorder %s28, 0
      %p115 = por %p113, %p114
      %p116 = scmp.ne.s32.totalorder %s102, %s103
      %p117 = scmp.eq.s32.totalorder %s29, 3
      %p118 = por %p116, %p117
      %p120 = scmp.ne.s32.totalorder %s103, %s119
      %p121 = scmp.eq.s32.totalorder %s29, 0
      %p122 = por %p120, %p121
      %s123 = ssub.s32 %s30, %s42
      %p124 = scmp.eq.s32.totalorder %s123, 0
      %s126 = sadd.s32 %s125, 1
      %s127 = scalar_select %p124, %s125, %s126
      %p130 = pneg %p124
      %p131 = scmp.eq.s32.totalorder %s23, 3
      %p132 = por %p130, %p131
      %p133 = scmp.ne.s32.totalorder %s125, %s128
      %p134 = scmp.eq.s32.totalorder %s23, 0
      %p135 = por %p133, %p134
      %p136 = scmp.ne.s32.totalorder %s125, %s128
      %p137 = scmp.eq.s32.totalorder %s28, 3
      %p138 = por %p136, %p137
      %p139 = scmp.ne.s32.totalorder %s128, %s129
      %p140 = scmp.eq.s32.totalorder %s28, 0
      %p141 = por %p139, %p140
      %p142 = scmp.ne.s32.totalorder %s128, %s129
      %p143 = scmp.eq.s32.totalorder %s29, 3
      %p144 = por %p142, %p143
      %p146 = scmp.ne.s32.totalorder %s129, %s145
      %p147 = scmp.eq.s32.totalorder %s29, 0
      %p148 = por %p146, %p147
      %s149 = ssub.s32 %s30, %s42
      %p150 = scmp.eq.s32.totalorder %s149, 0
      %s152 = sadd.s32 %s151, 1
      %s153 = scalar_select %p150, %s151, %s152
      %p156 = pneg %p150
      %p157 = scmp.eq.s32.totalorder %s23, 3
      %p158 = por %p156, %p157
      %p159 = scmp.ne.s32.totalorder %s151, %s154
      %p160 = scmp.eq.s32.totalorder %s23, 0
      %p161 = por %p159, %p160
      %p162 = scmp.ne.s32.totalorder %s151, %s154
      %p163 = scmp.eq.s32.totalorder %s28, 3
      %p164 = por %p162, %p163
      %p165 = scmp.ne.s32.totalorder %s154, %s155
      %p166 = scmp.eq.s32.totalorder %s28, 0
      %p167 = por %p165, %p166
      %p168 = scmp.ne.s32.totalorder %s154, %s155
      %p169 = scmp.eq.s32.totalorder %s29, 3
      %p170 = por %p168, %p169
      %p172 = scmp.ne.s32.totalorder %s155, %s171
      %p173 = scmp.eq.s32.totalorder %s29, 0
      %p174 = por %p172, %p173
      %p175 = scmp.le.s32.totalorder 1, %s23
      %p176 = scmp.lt.s32.totalorder %s23, 5
      %p177 = pnand %p175, %p176
      %p178 = pneg %p177
      // Predicated region
      $region9: #{tpu_custom_call.1} parent=5 // pred_check
        _
      $region10: #{tpu_custom_call.1} parent=5 // pred_check_branch
        %180 = sbr.rel (%p177) target = $region12
      $region11: #{tpu_custom_call.1} parent=5 // pred_region
        %s181 = ssub.s32 %s23, 1
      $region12: #{tpu_custom_call.1} parent=5 // pred_fallthru
        _
      %p182 = scmp.lt.s32.totalorder %s23, 4
      // Predicated region
      $region13: #{tpu_custom_call.1} parent=5 // pred_check
        %p183 = pneg %p182
      $region14: #{tpu_custom_call.1} parent=5 // pred_check_branch
        %185 = sbr.rel (%p183) target = $region16
      $region15: #{tpu_custom_call.1} parent=5 // pred_region
        // Predicated region
        $region17: #{tpu_custom_call.1} parent=15 // pred_check
          %p186 = pneg %p57
        $region18: #{tpu_custom_call.1} parent=15 // pred_check_branch
          %188 = sbr.rel (%p186) target = $region20
        $region19: #{tpu_custom_call.1} parent=15 // pred_region
          %s189 = sand.u32 %s47, 1
          %s190 = scalar_lea.sflag [#allocation4], %s189
          %s191 = sand.u32 %s47, 1
          %s192 = smul.addr %s191, 256
          %s193 = scalar_lea.vmem [#allocation3], %s192
          %s194 = smul.u32 32, %s30
          %s195 = smul.u32 2, %s31
          %s197 = ssub.s32 4096, 4096
          %198 = vsyncadd %s190, %s197
          %s199 = smul.addr %s194, 4
          %s200 = sadd.s32 %s195, %s199
          %s201 = smul.addr %s200, 64
          %s202 = scalar_lea.hbm %s0, %s201
          %s203 = sshll.u32 %s193, 4
          %s204 = int_to_ptr.vmem [resolvable:$true] %s203
          %209 = dma.hbm_to_vmem [thread:$0]  %s202, 4096, %s204, %s190, 256, 128, 8
        $region20: #{tpu_custom_call.1} parent=15 // pred_fallthru
          _
        // Predicated region
        $region21: #{tpu_custom_call.1} parent=15 // pred_check
          %p210 = pneg %p83
        $region22: #{tpu_custom_call.1} parent=15 // pred_check_branch
          %212 = sbr.rel (%p210) target = $region24
        $region23: #{tpu_custom_call.1} parent=15 // pred_region
          %s213 = sand.u32 %s23, 1
          %s214 = scalar_lea.sflag [#allocation7], %s213
          %s215 = sand.u32 %s73, 1
          %s216 = smul.addr %s215, 256
          %s217 = scalar_lea.vmem [#allocation6], %s216
          %s218 = smul.u32 32, %s31
          %s220 = ssub.s32 4096, 4096
          %221 = vsyncadd %s214, %s220
          %s222 = smul.addr %s218, 128
          %s223 = scalar_lea.hbm %s1, %s222
          %s224 = sshll.u32 %s217, 4
          %s225 = int_to_ptr.vmem [resolvable:$true] %s224
          %230 = dma.hbm_to_vmem [thread:$0]  %s223, 4096, %s225, %s214, 128, 128, 8
        $region24: #{tpu_custom_call.1} parent=15 // pred_fallthru
          _
        // Predicated region
        $region25: #{tpu_custom_call.1} parent=15 // pred_check
          %p231 = pneg %p109
        $region26: #{tpu_custom_call.1} parent=15 // pred_check_branch
          %233 = sbr.rel (%p231) target = $region28
        $region27: #{tpu_custom_call.1} parent=15 // pred_region
          %s234 = sand.u32 %s23, 1
          %s235 = scalar_lea.sflag [#allocation7], %s234
          %s236 = sand.u32 %s99, 1
          %s237 = smul.addr %s236, 256
          %s238 = scalar_lea.vmem [#allocation8], %s237
          %s239 = smul.u32 32, %s30
          %s241 = ssub.s32 4096, 4096
          %242 = vsyncadd %s235, %s241
          %s243 = smul.addr %s239, 128
          %s244 = scalar_lea.hbm %s2, %s243
          %s245 = sshll.u32 %s238, 4
          %s246 = int_to_ptr.vmem [resolvable:$true] %s245
          %251 = dma.hbm_to_vmem [thread:$0]  %s244, 4096, %s246, %s235, 128, 128, 8
        $region28: #{tpu_custom_call.1} parent=15 // pred_fallthru
          _
      $region16: #{tpu_custom_call.1} parent=5 // pred_fallthru
        _
      %p252 = scmp.le.s32.totalorder 1, %s23
      %p253 = scmp.lt.s32.totalorder %s23, 5
      %p254 = pnand %p252, %p253
      %p255 = pneg %p254
      // Predicated region
      $region29: #{tpu_custom_call.1} parent=5 // pred_check
        _
      $region30: #{tpu_custom_call.1} parent=5 // pred_check_branch
        %257 = sbr.rel (%p254) target = $region32
      $region31: #{tpu_custom_call.1} parent=5 // pred_region
        %s258 = ssub.s32 %s23, 1
        %s259 = sand.u32 %s50, 1
        %s260 = scalar_lea.sflag [#allocation4], %s259
        %s261 = sand.u32 %s50, 1
        %s262 = smul.addr %s261, 256
        %s263 = scalar_lea.vmem [#allocation3], %s262
        // Predicated region
        $region33: #{tpu_custom_call.1} parent=31 // pred_check
          %p264 = pneg %p63
        $region34: #{tpu_custom_call.1} parent=31 // pred_check_branch
          %266 = sbr.rel (%p264) target = $region36
        $region35: #{tpu_custom_call.1} parent=31 // pred_region
          %267 = dma.done %s260, 4096
        $region36: #{tpu_custom_call.1} parent=31 // pred_fallthru
          _
        %s268 = sand.u32 %s28, 1
        %s269 = scalar_lea.sflag [#allocation7], %s268
        %s270 = sand.u32 %s76, 1
        %s271 = smul.addr %s270, 256
        %s272 = scalar_lea.vmem [#allocation6], %s271
        // Predicated region
        $region37: #{tpu_custom_call.1} parent=31 // pred_check
          %p273 = pneg %p89
        $region38: #{tpu_custom_call.1} parent=31 // pred_check_branch
          %275 = sbr.rel (%p273) target = $region40
        $region39: #{tpu_custom_call.1} parent=31 // pred_region
          %276 = dma.done %s269, 4096
        $region40: #{tpu_custom_call.1} parent=31 // pred_fallthru
          _
        %s277 = sand.u32 %s28, 1
        %s278 = scalar_lea.sflag [#allocation7], %s277
        %s279 = sand.u32 %s102, 1
        %s280 = smul.addr %s279, 256
        %s281 = scalar_lea.vmem [#allocation8], %s280
        // Predicated region
        $region41: #{tpu_custom_call.1} parent=31 // pred_check
          %p282 = pneg %p115
        $region42: #{tpu_custom_call.1} parent=31 // pred_check_branch
          %284 = sbr.rel (%p282) target = $region44
        $region43: #{tpu_custom_call.1} parent=31 // pred_region
          %285 = dma.done %s278, 4096
        $region44: #{tpu_custom_call.1} parent=31 // pred_fallthru
          _
        %s286 = sand.u32 %s50, 1
        %s287 = scalar_lea.sflag [#allocation4], %s286
        %s288 = sand.u32 %s50, 1
        %s289 = smul.addr %s288, 256
        %s290 = scalar_lea.vmem [#allocation3], %s289
        %p291 = pneg %p63
        %p292 = pneg %p60
        %s293 = sand.u32 %s28, 1
        %s294 = scalar_lea.sflag [#allocation7], %s293
        %s295 = sand.u32 %s76, 1
        %s296 = smul.addr %s295, 256
        %s297 = scalar_lea.vmem [#allocation6], %s296
        %p298 = pneg %p89
        %p299 = pneg %p86
        %s300 = sand.u32 %s28, 1
        %s301 = scalar_lea.sflag [#allocation7], %s300
        %s302 = sand.u32 %s102, 1
        %s303 = smul.addr %s302, 256
        %s304 = scalar_lea.vmem [#allocation8], %s303
        %p305 = pneg %p115
        %p306 = pneg %p112
        %p307 = pneg %p141
        %p308 = pneg %p138
        %s309 = sand.u32 %s128, 1
        %s310 = scalar_lea.sflag [#allocation5], %s309
        %s311 = sand.u32 %s128, 1
        %s312 = smul.addr %s311, 256
        %s313 = scalar_lea.vmem [#allocation9], %s312
        %p314 = pneg %p167
        %p315 = pneg %p164
        %s316 = sand.u32 %s154, 1
        %s317 = scalar_lea.sflag [#allocation11], %s316
        %s318 = sand.u32 %s154, 1
        %s319 = smul.addr %s318, 256
        %s320 = scalar_lea.vmem [#allocation10], %s319
        %s321 = smul.u32 32, %s32
        %s322 = smul.u32 2, %s33
        %s323 = smul.u32 32, %s33
        %s324 = smul.u32 32, %s32
        %s325 = smul.u32 32, %s32
        %s326 = smul.u32 32, %s32
        %p328 = scmp.eq.s32.totalorder %s33, 0
        // Predicated region
        $region45: #{tpu_custom_call.1} parent=31 // pred_check
          %p329 = pneg %p328
        $region46: #{tpu_custom_call.1} parent=31 // pred_check_branch
          %331 = sbr.rel (%p329) target = $region48
        $region47: #{tpu_custom_call.1} parent=31 // pred_region
          %332 = vst [vmem:[#allocation2] sm:$0xff] 0.0
          %333 = vst [vmem:[#allocation2 + $0x8] sm:$0xff] 0.0
          %334 = vst [vmem:[#allocation2 + $0x10] sm:$0xff] 0.0
          %335 = vst [vmem:[#allocation2 + $0x18] sm:$0xff] 0.0
          %336 = vst [vmem:[#allocation2 + $0x20] sm:$0xff] 0.0
          %337 = vst [vmem:[#allocation2 + $0x28] sm:$0xff] 0.0
          %338 = vst [vmem:[#allocation2 + $0x30] sm:$0xff] 0.0
          %339 = vst [vmem:[#allocation2 + $0x38] sm:$0xff] 0.0
          %340 = vst [vmem:[#allocation2 + $0x40] sm:$0xff] 0.0
          %341 = vst [vmem:[#allocation2 + $0x48] sm:$0xff] 0.0
          %342 = vst [vmem:[#allocation2 + $0x50] sm:$0xff] 0.0
          %343 = vst [vmem:[#allocation2 + $0x58] sm:$0xff] 0.0
          %344 = vst [vmem:[#allocation2 + $0x60] sm:$0xff] 0.0
          %345 = vst [vmem:[#allocation2 + $0x68] sm:$0xff] 0.0
          %346 = vst [vmem:[#allocation2 + $0x70] sm:$0xff] 0.0
          %347 = vst [vmem:[#allocation2 + $0x78] sm:$0xff] 0.0
          %348 = vst [vmem:[#allocation2 + $0x80] sm:$0xff] 0.0
          %349 = vst [vmem:[#allocation2 + $0x88] sm:$0xff] 0.0
          %350 = vst [vmem:[#allocation2 + $0x90] sm:$0xff] 0.0
          %351 = vst [vmem:[#allocation2 + $0x98] sm:$0xff] 0.0
          %352 = vst [vmem:[#allocation2 + $0xa0] sm:$0xff] 0.0
          %353 = vst [vmem:[#allocation2 + $0xa8] sm:$0xff] 0.0
          %354 = vst [vmem:[#allocation2 + $0xb0] sm:$0xff] 0.0
          %355 = vst [vmem:[#allocation2 + $0xb8] sm:$0xff] 0.0
          %356 = vst [vmem:[#allocation2 + $0xc0] sm:$0xff] 0.0
          %357 = vst [vmem:[#allocation2 + $0xc8] sm:$0xff] 0.0
          %358 = vst [vmem:[#allocation2 + $0xd0] sm:$0xff] 0.0
          %359 = vst [vmem:[#allocation2 + $0xd8] sm:$0xff] 0.0
          %360 = vst [vmem:[#allocation2 + $0xe0] sm:$0xff] 0.0
          %361 = vst [vmem:[#allocation2 + $0xe8] sm:$0xff] 0.0
          %362 = vst [vmem:[#allocation2 + $0xf0] sm:$0xff] 0.0
          %363 = vst [vmem:[#allocation2 + $0xf8] sm:$0xff] 0.0
        $region48: #{tpu_custom_call.1} parent=31 // pred_fallthru
          _
        %v364 = vld [vmem:[#allocation2] sm:$0xff]
        %v365 = vld [vmem:[#allocation2 + $0x8] sm:$0xff]
        %v366 = vld [vmem:[#allocation2 + $0x10] sm:$0xff]
        %v367 = vld [vmem:[#allocation2 + $0x18] sm:$0xff]
        %v368 = vld [vmem:[#allocation2 + $0x20] sm:$0xff]
        %v369 = vld [vmem:[#allocation2 + $0x28] sm:$0xff]
        %v370 = vld [vmem:[#allocation2 + $0x30] sm:$0xff]
        %v371 = vld [vmem:[#allocation2 + $0x38] sm:$0xff]
        %v372 = vld [vmem:[#allocation2 + $0x40] sm:$0xff]
        %v373 = vld [vmem:[#allocation2 + $0x48] sm:$0xff]
        %v374 = vld [vmem:[#allocation2 + $0x50] sm:$0xff]
        %v375 = vld [vmem:[#allocation2 + $0x58] sm:$0xff]
        %v376 = vld [vmem:[#allocation2 + $0x60] sm:$0xff]
        %v377 = vld [vmem:[#allocation2 + $0x68] sm:$0xff]
        %v378 = vld [vmem:[#allocation2 + $0x70] sm:$0xff]
        %v379 = vld [vmem:[#allocation2 + $0x78] sm:$0xff]
        %v380 = vld [vmem:[#allocation2 + $0x80] sm:$0xff]
        %v381 = vld [vmem:[#allocation2 + $0x88] sm:$0xff]
        %v382 = vld [vmem:[#allocation2 + $0x90] sm:$0xff]
        %v383 = vld [vmem:[#allocation2 + $0x98] sm:$0xff]
        %v384 = vld [vmem:[#allocation2 + $0xa0] sm:$0xff]
        %v385 = vld [vmem:[#allocation2 + $0xa8] sm:$0xff]
        %v386 = vld [vmem:[#allocation2 + $0xb0] sm:$0xff]
        %v387 = vld [vmem:[#allocation2 + $0xb8] sm:$0xff]
        %v388 = vld [vmem:[#allocation2 + $0xc0] sm:$0xff]
        %v389 = vld [vmem:[#allocation2 + $0xc8] sm:$0xff]
        %v390 = vld [vmem:[#allocation2 + $0xd0] sm:$0xff]
        %v391 = vld [vmem:[#allocation2 + $0xd8] sm:$0xff]
        %v392 = vld [vmem:[#allocation2 + $0xe0] sm:$0xff]
        %v393 = vld [vmem:[#allocation2 + $0xe8] sm:$0xff]
        %v394 = vld [vmem:[#allocation2 + $0xf0] sm:$0xff]
        %v395 = vld [vmem:[#allocation2 + $0xf8] sm:$0xff]
        %v396 = vld [vmem:[%s263] sm:$0xff]
        %v397 = vld [vmem:[%s263 + $0x8] sm:$0xff]
        %v398 = vld [vmem:[%s263 + $0x10] sm:$0xff]
        %v399 = vld [vmem:[%s263 + $0x18] sm:$0xff]
        %v400 = vld [vmem:[%s263 + $0x20] sm:$0xff]
        %v401 = vld [vmem:[%s263 + $0x28] sm:$0xff]
        %v402 = vld [vmem:[%s263 + $0x30] sm:$0xff]
        %v403 = vld [vmem:[%s263 + $0x38] sm:$0xff]
        %v404 = vld [vmem:[%s263 + $0x40] sm:$0xff]
        %v405 = vld [vmem:[%s263 + $0x48] sm:$0xff]
        %v406 = vld [vmem:[%s263 + $0x50] sm:$0xff]
        %v407 = vld [vmem:[%s263 + $0x58] sm:$0xff]
        %v408 = vld [vmem:[%s263 + $0x60] sm:$0xff]
        %v409 = vld [vmem:[%s263 + $0x68] sm:$0xff]
        %v410 = vld [vmem:[%s263 + $0x70] sm:$0xff]
        %v411 = vld [vmem:[%s263 + $0x78] sm:$0xff]
        %v412 = vld [vmem:[%s263 + $0x80] sm:$0xff]
        %v413 = vld [vmem:[%s263 + $0x88] sm:$0xff]
        %v414 = vld [vmem:[%s263 + $0x90] sm:$0xff]
        %v415 = vld [vmem:[%s263 + $0x98] sm:$0xff]
        %v416 = vld [vmem:[%s263 + $0xa0] sm:$0xff]
        %v417 = vld [vmem:[%s263 + $0xa8] sm:$0xff]
        %v418 = vld [vmem:[%s263 + $0xb0] sm:$0xff]
        %v419 = vld [vmem:[%s263 + $0xb8] sm:$0xff]
        %v420 = vld [vmem:[%s263 + $0xc0] sm:$0xff]
        %v421 = vld [vmem:[%s263 + $0xc8] sm:$0xff]
        %v422 = vld [vmem:[%s263 + $0xd0] sm:$0xff]
        %v423 = vld [vmem:[%s263 + $0xd8] sm:$0xff]
        %v424 = vld [vmem:[%s263 + $0xe0] sm:$0xff]
        %v425 = vld [vmem:[%s263 + $0xe8] sm:$0xff]
        %v426 = vld [vmem:[%s263 + $0xf0] sm:$0xff]
        %v427 = vld [vmem:[%s263 + $0xf8] sm:$0xff]
        %v428 = vld [vmem:[%s272] sm:$0xff]
        %v429 = vld [vmem:[%s272 + $0x8] sm:$0xff]
        %v430 = vld [vmem:[%s272 + $0x10] sm:$0xff]
        %v431 = vld [vmem:[%s272 + $0x18] sm:$0xff]
        %v432 = vld [vmem:[%s272 + $0x20] sm:$0xff]
        %v433 = vld [vmem:[%s272 + $0x28] sm:$0xff]
        %v434 = vld [vmem:[%s272 + $0x30] sm:$0xff]
        %v435 = vld [vmem:[%s272 + $0x38] sm:$0xff]
        %v436 = vld [vmem:[%s272 + $0x40] sm:$0xff]
        %v437 = vld [vmem:[%s272 + $0x48] sm:$0xff]
        %v438 = vld [vmem:[%s272 + $0x50] sm:$0xff]
        %v439 = vld [vmem:[%s272 + $0x58] sm:$0xff]
        %v440 = vld [vmem:[%s272 + $0x60] sm:$0xff]
        %v441 = vld [vmem:[%s272 + $0x68] sm:$0xff]
        %v442 = vld [vmem:[%s272 + $0x70] sm:$0xff]
        %v443 = vld [vmem:[%s272 + $0x78] sm:$0xff]
        %v444 = vld [vmem:[%s272 + $0x80] sm:$0xff]
        %v445 = vld [vmem:[%s272 + $0x88] sm:$0xff]
        %v446 = vld [vmem:[%s272 + $0x90] sm:$0xff]
        %v447 = vld [vmem:[%s272 + $0x98] sm:$0xff]
        %v448 = vld [vmem:[%s272 + $0xa0] sm:$0xff]
        %v449 = vld [vmem:[%s272 + $0xa8] sm:$0xff]
        %v450 = vld [vmem:[%s272 + $0xb0] sm:$0xff]
        %v451 = vld [vmem:[%s272 + $0xb8] sm:$0xff]
        %v452 = vld [vmem:[%s272 + $0xc0] sm:$0xff]
        %v453 = vld [vmem:[%s272 + $0xc8] sm:$0xff]
        %v454 = vld [vmem:[%s272 + $0xd0] sm:$0xff]
        %v455 = vld [vmem:[%s272 + $0xd8] sm:$0xff]
        %v456 = vld [vmem:[%s272 + $0xe0] sm:$0xff]
        %v457 = vld [vmem:[%s272 + $0xe8] sm:$0xff]
        %v458 = vld [vmem:[%s272 + $0xf0] sm:$0xff]
        %v459 = vld [vmem:[%s272 + $0xf8] sm:$0xff]
        %v460 = vpack.c.bf16 %v429, %v428
        %v461 = vpack.c.bf16 %v431, %v430
        %v462 = vpack.c.bf16 %v433, %v432
        %v463 = vpack.c.bf16 %v435, %v434
        %v464 = vpack.c.bf16 %v437, %v436
        %v465 = vpack.c.bf16 %v439, %v438
        %v466 = vpack.c.bf16 %v441, %v440
        %v467 = vpack.c.bf16 %v443, %v442
        %v468 = vpack.c.bf16 %v445, %v444
        %v469 = vpack.c.bf16 %v447, %v446
        %v470 = vpack.c.bf16 %v449, %v448
        %v471 = vpack.c.bf16 %v451, %v450
        %v472 = vpack.c.bf16 %v453, %v452
        %v473 = vpack.c.bf16 %v455, %v454
        %v474 = vpack.c.bf16 %v457, %v456
        %v475 = vpack.c.bf16 %v459, %v458
        %v508 = vunpack.c.l.b16 %v396
        %v509 = vunpack.c.h.b16 %v396
        %v510 = vunpack.c.l.b16 %v397
        %v511 = vunpack.c.h.b16 %v397
        %v512 = vunpack.c.l.b16 %v398
        %v513 = vunpack.c.h.b16 %v398
        %v514 = vunpack.c.l.b16 %v399
        %v515 = vunpack.c.h.b16 %v399
        %v516 = vunpack.c.l.b16 %v400
        %v517 = vunpack.c.h.b16 %v400
        %v518 = vunpack.c.l.b16 %v401
        %v519 = vunpack.c.h.b16 %v401
        %v520 = vunpack.c.l.b16 %v402
        %v521 = vunpack.c.h.b16 %v402
        %v522 = vunpack.c.l.b16 %v403
        %v523 = vunpack.c.h.b16 %v403
        %v524 = vunpack.c.l.b16 %v404
        %v525 = vunpack.c.h.b16 %v404
        %v526 = vunpack.c.l.b16 %v405
        %v527 = vunpack.c.h.b16 %v405
        %v528 = vunpack.c.l.b16 %v406
        %v529 = vunpack.c.h.b16 %v406
        %v530 = vunpack.c.l.b16 %v407
        %v531 = vunpack.c.h.b16 %v407
        %v532 = vunpack.c.l.b16 %v408
        %v533 = vunpack.c.h.b16 %v408
        %v534 = vunpack.c.l.b16 %v409
        %v535 = vunpack.c.h.b16 %v409
        %v536 = vunpack.c.l.b16 %v410
        %v537 = vunpack.c.h.b16 %v410
        %v538 = vunpack.c.l.b16 %v411
        %v539 = vunpack.c.h.b16 %v411
        %v540 = vunpack.c.l.b16 %v412
        %v541 = vunpack.c.h.b16 %v412
        %v542 = vunpack.c.l.b16 %v413
        %v543 = vunpack.c.h.b16 %v413
        %v544 = vunpack.c.l.b16 %v414
        %v545 = vunpack.c.h.b16 %v414
        %v546 = vunpack.c.l.b16 %v415
        %v547 = vunpack.c.h.b16 %v415
        %v548 = vunpack.c.l.b16 %v416
        %v549 = vunpack.c.h.b16 %v416
        %v550 = vunpack.c.l.b16 %v417
        %v551 = vunpack.c.h.b16 %v417
        %v552 = vunpack.c.l.b16 %v418
        %v553 = vunpack.c.h.b16 %v418
        %v554 = vunpack.c.l.b16 %v419
        %v555 = vunpack.c.h.b16 %v419
        %v556 = vunpack.c.l.b16 %v420
        %v557 = vunpack.c.h.b16 %v420
        %v558 = vunpack.c.l.b16 %v421
        %v559 = vunpack.c.h.b16 %v421
        %v560 = vunpack.c.l.b16 %v422
        %v561 = vunpack.c.h.b16 %v422
        %v562 = vunpack.c.l.b16 %v423
        %v563 = vunpack.c.h.b16 %v423
        %v564 = vunpack.c.l.b16 %v424
        %v565 = vunpack.c.h.b16 %v424
        %v566 = vunpack.c.l.b16 %v425
        %v567 = vunpack.c.h.b16 %v425
        %v568 = vunpack.c.l.b16 %v426
        %v569 = vunpack.c.h.b16 %v426
        %v570 = vunpack.c.l.b16 %v427
        %v571 = vunpack.c.h.b16 %v427
        %v572 = vpack.c.b16 %v510, %v508
        %v573 = vpack.c.b16 %v511, %v509
        %v574 = vpack.c.b16 %v514, %v512
        %v575 = vpack.c.b16 %v515, %v513
        %v576 = vpack.c.b16 %v518, %v516
        %v577 = vpack.c.b16 %v519, %v517
        %v578 = vpack.c.b16 %v522, %v520
        %v579 = vpack.c.b16 %v523, %v521
        %v580 = vpack.c.b16 %v526, %v524
        %v581 = vpack.c.b16 %v527, %v525
        %v582 = vpack.c.b16 %v530, %v528
        %v583 = vpack.c.b16 %v531, %v529
        %v584 = vpack.c.b16 %v534, %v532
        %v585 = vpack.c.b16 %v535, %v533
        %v586 = vpack.c.b16 %v538, %v536
        %v587 = vpack.c.b16 %v539, %v537
        %v588 = vpack.c.b16 %v542, %v540
        %v589 = vpack.c.b16 %v543, %v541
        %v590 = vpack.c.b16 %v546, %v544
        %v591 = vpack.c.b16 %v547, %v545
        %v592 = vpack.c.b16 %v550, %v548
        %v593 = vpack.c.b16 %v551, %v549
        %v594 = vpack.c.b16 %v554, %v552
        %v595 = vpack.c.b16 %v555, %v553
        %v596 = vpack.c.b16 %v558, %v556
        %v597 = vpack.c.b16 %v559, %v557
        %v598 = vpack.c.b16 %v562, %v560
        %v599 = vpack.c.b16 %v563, %v561
        %v600 = vpack.c.b16 %v566, %v564
        %v601 = vpack.c.b16 %v567, %v565
        %v602 = vpack.c.b16 %v570, %v568
        %v603 = vpack.c.b16 %v571, %v569
        %636 = vmatprep.subr.bf16.mxu0 0
        %637 = vmatpush1.bf16.msra.mxu0 %v460
        %638 = vmatprep.subr.bf16.mxu0 0
        %639 = vmatpush1.bf16.msra.mxu0 %v461
        %640 = vmatprep.subr.bf16.mxu0 0
        %641 = vmatpush1.bf16.msra.mxu0 %v462
        %642 = vmatprep.subr.bf16.mxu0 0
        %643 = vmatpush1.bf16.msra.mxu0 %v463
        %644 = vmatprep.subr.bf16.mxu0 0
        %645 = vmatpush1.bf16.msra.mxu0 %v464
        %646 = vmatprep.subr.bf16.mxu0 0
        %647 = vmatpush1.bf16.msra.mxu0 %v465
        %648 = vmatprep.subr.bf16.mxu0 0
        %649 = vmatpush1.bf16.msra.mxu0 %v466
        %650 = vmatprep.subr.bf16.mxu0 0
        %651 = vmatpush1.bf16.msra.mxu0 %v467
        %652 = vmatprep.subr.bf16.mxu0 0
        %653 = vmatpush1.bf16.msra.mxu0 %v468
        %654 = vmatprep.subr.bf16.mxu0 0
        %655 = vmatpush1.bf16.msra.mxu0 %v469
        %656 = vmatprep.subr.bf16.mxu0 0
        %657 = vmatpush1.bf16.msra.mxu0 %v470
        %658 = vmatprep.subr.bf16.mxu0 0
        %659 = vmatpush1.bf16.msra.mxu0 %v471
        %660 = vmatprep.subr.bf16.mxu0 0
        %661 = vmatpush1.bf16.msra.mxu0 %v472
        %662 = vmatprep.subr.bf16.mxu0 0
        %663 = vmatpush1.bf16.msra.mxu0 %v473
        %664 = vmatprep.subr.bf16.mxu0 0
        %665 = vmatpush1.bf16.msra.mxu0 %v474
        %666 = vmatprep.subr.bf16.mxu0 0
        %667 = vmatpush1.bf16.msra.mxu0 %v475
        %668 = vmatprep.mubr.bf16.mxu0 %v573
        %669 = vmatmul.mubr.bf16.gmra.mrb[0].mxu0 %v572
        %v670 = vpop.f32.mrb[0].mxu0
        %v671 = vadd.f32 0.0, %v670
        %v672 = vpop.f32.mrb[0].mxu0
        %v673 = vpop.f32.mrb[0].mxu0
        %v674 = vadd.f32 0.0, %v673
        %v675 = vpop.f32.mrb[0].mxu0
        %676 = vmatprep.mubr.bf16.mxu0 %v575
        %677 = vmatmul.mubr.bf16.gmra.mrb[0].mxu0 %v574
        %v678 = vpop.f32.mrb[0].mxu0
        %v679 = vadd.f32 0.0, %v678
        %v680 = vpop.f32.mrb[0].mxu0
        %v681 = vpop.f32.mrb[0].mxu0
        %v682 = vadd.f32 0.0, %v681
        %v683 = vpop.f32.mrb[0].mxu0
        %684 = vmatprep.mubr.bf16.mxu0 %v577
        %685 = vmatmul.mubr.bf16.gmra.mrb[0].mxu0 %v576
        %v686 = vpop.f32.mrb[0].mxu0
        %v687 = vadd.f32 0.0, %v686
        %v688 = vpop.f32.mrb[0].mxu0
        %v689 = vpop.f32.mrb[0].mxu0
        %v690 = vadd.f32 0.0, %v689
        %v691 = vpop.f32.mrb[0].mxu0
        %692 = vmatprep.mubr.bf16.mxu0 %v579
        %693 = vmatmul.mubr.bf16.gmra.mrb[0].mxu0 %v578
        %v694 = vpop.f32.mrb[0].mxu0
        %v695 = vadd.f32 0.0, %v694
        %v696 = vpop.f32.mrb[0].mxu0
        %v697 = vpop.f32.mrb[0].mxu0
        %v698 = vadd.f32 0.0, %v697
        %v699 = vpop.f32.mrb[0].mxu0
        %700 = vmatprep.mubr.bf16.mxu0 %v581
        %701 = vmatmul.mubr.bf16.gmra.mrb[0].mxu0 %v580
        %v702 = vpop.f32.mrb[0].mxu0
        %v703 = vadd.f32 0.0, %v702
        %v704 = vpop.f32.mrb[0].mxu0
        %v705 = vpop.f32.mrb[0].mxu0
        %v706 = vadd.f32 0.0, %v705
        %v707 = vpop.f32.mrb[0].mxu0
        %708 = vmatprep.mubr.bf16.mxu0 %v583
        %709 = vmatmul.mubr.bf16.gmra.mrb[0].mxu0 %v582
        %v710 = vpop.f32.mrb[0].mxu0
        %v711 = vadd.f32 0.0, %v710
        %v712 = vpop.f32.mrb[0].mxu0
        %v713 = vpop.f32.mrb[0].mxu0
        %v714 = vadd.f32 0.0, %v713
        %v715 = vpop.f32.mrb[0].mxu0
        %716 = vmatprep.mubr.bf16.mxu0 %v585
        %717 = vmatmul.mubr.bf16.gmra.mrb[0].mxu0 %v584
        %v718 = vpop.f32.mrb[0].mxu0
        %v719 = vadd.f32 0.0, %v718
        %v720 = vpop.f32.mrb[0].mxu0
        %v721 = vpop.f32.mrb[0].mxu0
        %v722 = vadd.f32 0.0, %v721
        %v723 = vpop.f32.mrb[0].mxu0
        %724 = vmatprep.mubr.bf16.mxu0 %v587
        %725 = vmatmul.mubr.bf16.gmra.mrb[0].mxu0 %v586
        %v726 = vpop.f32.mrb[0].mxu0
        %v727 = vadd.f32 0.0, %v726
        %v728 = vpop.f32.mrb[0].mxu0
        %v729 = vpop.f32.mrb[0].mxu0
        %v730 = vadd.f32 0.0, %v729
        %v731 = vpop.f32.mrb[0].mxu0
        %732 = vmatprep.mubr.bf16.mxu0 %v589
        %733 = vmatmul.mubr.bf16.gmra.mrb[0].mxu0 %v588
        %v734 = vpop.f32.mrb[0].mxu0
        %v735 = vadd.f32 0.0, %v734
        %v736 = vpop.f32.mrb[0].mxu0
        %v737 = vpop.f32.mrb[0].mxu0
        %v738 = vadd.f32 0.0, %v737
        %v739 = vpop.f32.mrb[0].mxu0
        %740 = vmatprep.mubr.bf16.mxu0 %v591
        %741 = vmatmul.mubr.bf16.gmra.mrb[0].mxu0 %v590
        %v742 = vpop.f32.mrb[0].mxu0
        %v743 = vadd.f32 0.0, %v742
        %v744 = vpop.f32.mrb[0].mxu0
        %v745 = vpop.f32.mrb[0].mxu0
        %v746 = vadd.f32 0.0, %v745
        %v747 = vpop.f32.mrb[0].mxu0
        %748 = vmatprep.mubr.bf16.mxu0 %v593
        %749 = vmatmul.mubr.bf16.gmra.mrb[0].mxu0 %v592
        %v750 = vpop.f32.mrb[0].mxu0
        %v751 = vadd.f32 0.0, %v750
        %v752 = vpop.f32.mrb[0].mxu0
        %v753 = vpop.f32.mrb[0].mxu0
        %v754 = vadd.f32 0.0, %v753
        %v755 = vpop.f32.mrb[0].mxu0
        %756 = vmatprep.mubr.bf16.mxu0 %v595
        %757 = vmatmul.mubr.bf16.gmra.mrb[0].mxu0 %v594
        %v758 = vpop.f32.mrb[0].mxu0
        %v759 = vadd.f32 0.0, %v758
        %v760 = vpop.f32.mrb[0].mxu0
        %v761 = vpop.f32.mrb[0].mxu0
        %v762 = vadd.f32 0.0, %v761
        %v763 = vpop.f32.mrb[0].mxu0
        %764 = vmatprep.mubr.bf16.mxu0 %v597
        %765 = vmatmul.mubr.bf16.gmra.mrb[0].mxu0 %v596
        %v766 = vpop.f32.mrb[0].mxu0
        %v767 = vadd.f32 0.0, %v766
        %v768 = vpop.f32.mrb[0].mxu0
        %v769 = vpop.f32.mrb[0].mxu0
        %v770 = vadd.f32 0.0, %v769
        %v771 = vpop.f32.mrb[0].mxu0
        %772 = vmatprep.mubr.bf16.mxu0 %v599
        %773 = vmatmul.mubr.bf16.gmra.mrb[0].mxu0 %v598
        %v774 = vpop.f32.mrb[0].mxu0
        %v775 = vadd.f32 0.0, %v774
        %v776 = vpop.f32.mrb[0].mxu0
        %v777 = vpop.f32.mrb[0].mxu0
        %v778 = vadd.f32 0.0, %v777
        %v779 = vpop.f32.mrb[0].mxu0
        %780 = vmatprep.mubr.bf16.mxu0 %v601
        %781 = vmatmul.mubr.bf16.gmra.mrb[0].mxu0 %v600
        %v782 = vpop.f32.mrb[0].mxu0
        %v783 = vadd.f32 0.0, %v782
        %v784 = vpop.f32.mrb[0].mxu0
        %v785 = vpop.f32.mrb[0].mxu0
        %v786 = vadd.f32 0.0, %v785
        %v787 = vpop.f32.mrb[0].mxu0
        %788 = vmatprep.mubr.bf16.mxu0 %v603
        %789 = vmatmul.mubr.bf16.gmra.mrb[0].mxu0 %v602
        %v790 = vpop.f32.mrb[0].mxu0
        %v791 = vadd.f32 0.0, %v790
        %v792 = vpop.f32.mrb[0].mxu0
        %v793 = vpop.f32.mrb[0].mxu0
        %v794 = vadd.f32 0.0, %v793
        %v795 = vpop.f32.mrb[0].mxu0
        %796 = vdwg.mxu0
        %v797 = vadd.f32 %v364, %v671
        %v798 = vadd.f32 %v365, %v674
        %v799 = vadd.f32 %v366, %v679
        %v800 = vadd.f32 %v367, %v682
        %v801 = vadd.f32 %v368, %v687
        %v802 = vadd.f32 %v369, %v690
        %v803 = vadd.f32 %v370, %v695
        %v804 = vadd.f32 %v371, %v698
        %v805 = vadd.f32 %v372, %v703
        %v806 = vadd.f32 %v373, %v706
        %v807 = vadd.f32 %v374, %v711
        %v808 = vadd.f32 %v375, %v714
        %v809 = vadd.f32 %v376, %v719
        %v810 = vadd.f32 %v377, %v722
        %v811 = vadd.f32 %v378, %v727
        %v812 = vadd.f32 %v379, %v730
        %v813 = vadd.f32 %v380, %v735
        %v814 = vadd.f32 %v381, %v738
        %v815 = vadd.f32 %v382, %v743
        %v816 = vadd.f32 %v383, %v746
        %v817 = vadd.f32 %v384, %v751
        %v818 = vadd.f32 %v385, %v754
        %v819 = vadd.f32 %v386, %v759
        %v820 = vadd.f32 %v387, %v762
        %v821 = vadd.f32 %v388, %v767
        %v822 = vadd.f32 %v389, %v770
        %v823 = vadd.f32 %v390, %v775
        %v824 = vadd.f32 %v391, %v778
        %v825 = vadd.f32 %v392, %v783
        %v826 = vadd.f32 %v393, %v786
        %v827 = vadd.f32 %v394, %v791
        %v828 = vadd.f32 %v395, %v794
        %829 = vst [vmem:[#allocation2] sm:$0xff] %v797
        %830 = vst [vmem:[#allocation2 + $0x8] sm:$0xff] %v798
        %831 = vst [vmem:[#allocation2 + $0x10] sm:$0xff] %v799
        %832 = vst [vmem:[#allocation2 + $0x18] sm:$0xff] %v800
        %833 = vst [vmem:[#allocation2 + $0x20] sm:$0xff] %v801
        %834 = vst [vmem:[#allocation2 + $0x28] sm:$0xff] %v802
        %835 = vst [vmem:[#allocation2 + $0x30] sm:$0xff] %v803
        %836 = vst [vmem:[#allocation2 + $0x38] sm:$0xff] %v804
        %837 = vst [vmem:[#allocation2 + $0x40] sm:$0xff] %v805
        %838 = vst [vmem:[#allocation2 + $0x48] sm:$0xff] %v806
        %839 = vst [vmem:[#allocation2 + $0x50] sm:$0xff] %v807
        %840 = vst [vmem:[#allocation2 + $0x58] sm:$0xff] %v808
        %841 = vst [vmem:[#allocation2 + $0x60] sm:$0xff] %v809
        %842 = vst [vmem:[#allocation2 + $0x68] sm:$0xff] %v810
        %843 = vst [vmem:[#allocation2 + $0x70] sm:$0xff] %v811
        %844 = vst [vmem:[#allocation2 + $0x78] sm:$0xff] %v812
        %845 = vst [vmem:[#allocation2 + $0x80] sm:$0xff] %v813
        %846 = vst [vmem:[#allocation2 + $0x88] sm:$0xff] %v814
        %847 = vst [vmem:[#allocation2 + $0x90] sm:$0xff] %v815
        %848 = vst [vmem:[#allocation2 + $0x98] sm:$0xff] %v816
        %849 = vst [vmem:[#allocation2 + $0xa0] sm:$0xff] %v817
        %850 = vst [vmem:[#allocation2 + $0xa8] sm:$0xff] %v818
        %851 = vst [vmem:[#allocation2 + $0xb0] sm:$0xff] %v819
        %852 = vst [vmem:[#allocation2 + $0xb8] sm:$0xff] %v820
        %853 = vst [vmem:[#allocation2 + $0xc0] sm:$0xff] %v821
        %854 = vst [vmem:[#allocation2 + $0xc8] sm:$0xff] %v822
        %855 = vst [vmem:[#allocation2 + $0xd0] sm:$0xff] %v823
        %856 = vst [vmem:[#allocation2 + $0xd8] sm:$0xff] %v824
        %857 = vst [vmem:[#allocation2 + $0xe0] sm:$0xff] %v825
        %858 = vst [vmem:[#allocation2 + $0xe8] sm:$0xff] %v826
        %859 = vst [vmem:[#allocation2 + $0xf0] sm:$0xff] %v827
        %860 = vst [vmem:[#allocation2 + $0xf8] sm:$0xff] %v828
        %p861 = scmp.eq.s32.totalorder %s33, 1
        // Predicated region
        $region49: #{tpu_custom_call.1} parent=31 // pred_check
          %p862 = pneg %p861
        $region50: #{tpu_custom_call.1} parent=31 // pred_check_branch
          %864 = sbr.rel (%p862) target = $region52
        $region51: #{tpu_custom_call.1} parent=31 // pred_region
          %v865 = vld [vmem:[#allocation2] sm:$0xff]
          %v866 = vld [vmem:[#allocation2 + $0x8] sm:$0xff]
          %v867 = vld [vmem:[#allocation2 + $0x10] sm:$0xff]
          %v868 = vld [vmem:[#allocation2 + $0x18] sm:$0xff]
          %v869 = vld [vmem:[#allocation2 + $0x20] sm:$0xff]
          %v870 = vld [vmem:[#allocation2 + $0x28] sm:$0xff]
          %v871 = vld [vmem:[#allocation2 + $0x30] sm:$0xff]
          %v872 = vld [vmem:[#allocation2 + $0x38] sm:$0xff]
          %v873 = vld [vmem:[#allocation2 + $0x40] sm:$0xff]
          %v874 = vld [vmem:[#allocation2 + $0x48] sm:$0xff]
          %v875 = vld [vmem:[#allocation2 + $0x50] sm:$0xff]
          %v876 = vld [vmem:[#allocation2 + $0x58] sm:$0xff]
          %v877 = vld [vmem:[#allocation2 + $0x60] sm:$0xff]
          %v878 = vld [vmem:[#allocation2 + $0x68] sm:$0xff]
          %v879 = vld [vmem:[#allocation2 + $0x70] sm:$0xff]
          %v880 = vld [vmem:[#allocation2 + $0x78] sm:$0xff]
          %v881 = vld [vmem:[#allocation2 + $0x80] sm:$0xff]
          %v882 = vld [vmem:[#allocation2 + $0x88] sm:$0xff]
          %v883 = vld [vmem:[#allocation2 + $0x90] sm:$0xff]
          %v884 = vld [vmem:[#allocation2 + $0x98] sm:$0xff]
          %v885 = vld [vmem:[#allocation2 + $0xa0] sm:$0xff]
          %v886 = vld [vmem:[#allocation2 + $0xa8] sm:$0xff]
          %v887 = vld [vmem:[#allocation2 + $0xb0] sm:$0xff]
          %v888 = vld [vmem:[#allocation2 + $0xb8] sm:$0xff]
          %v889 = vld [vmem:[#allocation2 + $0xc0] sm:$0xff]
          %v890 = vld [vmem:[#allocation2 + $0xc8] sm:$0xff]
          %v891 = vld [vmem:[#allocation2 + $0xd0] sm:$0xff]
          %v892 = vld [vmem:[#allocation2 + $0xd8] sm:$0xff]
          %v893 = vld [vmem:[#allocation2 + $0xe0] sm:$0xff]
          %v894 = vld [vmem:[#allocation2 + $0xe8] sm:$0xff]
          %v895 = vld [vmem:[#allocation2 + $0xf0] sm:$0xff]
          %v896 = vld [vmem:[#allocation2 + $0xf8] sm:$0xff]
          %897 = vst [vmem:[%s313] sm:$0xff] %v865
          %898 = vst [vmem:[%s313 + $0x8] sm:$0xff] %v866
          %899 = vst [vmem:[%s313 + $0x10] sm:$0xff] %v867
          %900 = vst [vmem:[%s313 + $0x18] sm:$0xff] %v868
          %901 = vst [vmem:[%s313 + $0x20] sm:$0xff] %v869
          %902 = vst [vmem:[%s313 + $0x28] sm:$0xff] %v870
          %903 = vst [vmem:[%s313 + $0x30] sm:$0xff] %v871
          %904 = vst [vmem:[%s313 + $0x38] sm:$0xff] %v872
          %905 = vst [vmem:[%s313 + $0x40] sm:$0xff] %v873
          %906 = vst [vmem:[%s313 + $0x48] sm:$0xff] %v874
          %907 = vst [vmem:[%s313 + $0x50] sm:$0xff] %v875
          %908 = vst [vmem:[%s313 + $0x58] sm:$0xff] %v876
          %909 = vst [vmem:[%s313 + $0x60] sm:$0xff] %v877
          %910 = vst [vmem:[%s313 + $0x68] sm:$0xff] %v878
          %911 = vst [vmem:[%s313 + $0x70] sm:$0xff] %v879
          %912 = vst [vmem:[%s313 + $0x78] sm:$0xff] %v880
          %913 = vst [vmem:[%s313 + $0x80] sm:$0xff] %v881
          %914 = vst [vmem:[%s313 + $0x88] sm:$0xff] %v882
          %915 = vst [vmem:[%s313 + $0x90] sm:$0xff] %v883
          %916 = vst [vmem:[%s313 + $0x98] sm:$0xff] %v884
          %917 = vst [vmem:[%s313 + $0xa0] sm:$0xff] %v885
          %918 = vst [vmem:[%s313 + $0xa8] sm:$0xff] %v886
          %919 = vst [vmem:[%s313 + $0xb0] sm:$0xff] %v887
          %920 = vst [vmem:[%s313 + $0xb8] sm:$0xff] %v888
          %921 = vst [vmem:[%s313 + $0xc0] sm:$0xff] %v889
          %922 = vst [vmem:[%s313 + $0xc8] sm:$0xff] %v890
          %923 = vst [vmem:[%s313 + $0xd0] sm:$0xff] %v891
          %924 = vst [vmem:[%s313 + $0xd8] sm:$0xff] %v892
          %925 = vst [vmem:[%s313 + $0xe0] sm:$0xff] %v893
          %926 = vst [vmem:[%s313 + $0xe8] sm:$0xff] %v894
          %927 = vst [vmem:[%s313 + $0xf0] sm:$0xff] %v895
          %928 = vst [vmem:[%s313 + $0xf8] sm:$0xff] %v896
          %v929 = vld [vmem:[%s281] sm:$0xff]
          %v930 = vld [vmem:[%s281 + $0x8] sm:$0xff]
          %v931 = vld [vmem:[%s281 + $0x10] sm:$0xff]
          %v932 = vld [vmem:[%s281 + $0x18] sm:$0xff]
          %v933 = vld [vmem:[%s281 + $0x20] sm:$0xff]
          %v934 = vld [vmem:[%s281 + $0x28] sm:$0xff]
          %v935 = vld [vmem:[%s281 + $0x30] sm:$0xff]
          %v936 = vld [vmem:[%s281 + $0x38] sm:$0xff]
          %v937 = vld [vmem:[%s281 + $0x40] sm:$0xff]
          %v938 = vld [vmem:[%s281 + $0x48] sm:$0xff]
          %v939 = vld [vmem:[%s281 + $0x50] sm:$0xff]
          %v940 = vld [vmem:[%s281 + $0x58] sm:$0xff]
          %v941 = vld [vmem:[%s281 + $0x60] sm:$0xff]
          %v942 = vld [vmem:[%s281 + $0x68] sm:$0xff]
          %v943 = vld [vmem:[%s281 + $0x70] sm:$0xff]
          %v944 = vld [vmem:[%s281 + $0x78] sm:$0xff]
          %v945 = vld [vmem:[%s281 + $0x80] sm:$0xff]
          %v946 = vld [vmem:[%s281 + $0x88] sm:$0xff]
          %v947 = vld [vmem:[%s281 + $0x90] sm:$0xff]
          %v948 = vld [vmem:[%s281 + $0x98] sm:$0xff]
          %v949 = vld [vmem:[%s281 + $0xa0] sm:$0xff]
          %v950 = vld [vmem:[%s281 + $0xa8] sm:$0xff]
          %v951 = vld [vmem:[%s281 + $0xb0] sm:$0xff]
          %v952 = vld [vmem:[%s281 + $0xb8] sm:$0xff]
          %v953 = vld [vmem:[%s281 + $0xc0] sm:$0xff]
          %v954 = vld [vmem:[%s281 + $0xc8] sm:$0xff]
          %v955 = vld [vmem:[%s281 + $0xd0] sm:$0xff]
          %v956 = vld [vmem:[%s281 + $0xd8] sm:$0xff]
          %v957 = vld [vmem:[%s281 + $0xe0] sm:$0xff]
          %v958 = vld [vmem:[%s281 + $0xe8] sm:$0xff]
          %v959 = vld [vmem:[%s281 + $0xf0] sm:$0xff]
          %v960 = vld [vmem:[%s281 + $0xf8] sm:$0xff]
          %v961 = vadd.f32 %v929, %v865
          %v962 = vadd.f32 %v930, %v866
          %v963 = vadd.f32 %v931, %v867
          %v964 = vadd.f32 %v932, %v868
          %v965 = vadd.f32 %v933, %v869
          %v966 = vadd.f32 %v934, %v870
          %v967 = vadd.f32 %v935, %v871
          %v968 = vadd.f32 %v936, %v872
          %v969 = vadd.f32 %v937, %v873
          %v970 = vadd.f32 %v938, %v874
          %v971 = vadd.f32 %v939, %v875
          %v972 = vadd.f32 %v940, %v876
          %v973 = vadd.f32 %v941, %v877
          %v974 = vadd.f32 %v942, %v878
          %v975 = vadd.f32 %v943, %v879
          %v976 = vadd.f32 %v944, %v880
          %v977 = vadd.f32 %v945, %v881
          %v978 = vadd.f32 %v946, %v882
          %v979 = vadd.f32 %v947, %v883
          %v980 = vadd.f32 %v948, %v884
          %v981 = vadd.f32 %v949, %v885
          %v982 = vadd.f32 %v950, %v886
          %v983 = vadd.f32 %v951, %v887
          %v984 = vadd.f32 %v952, %v888
          %v985 = vadd.f32 %v953, %v889
          %v986 = vadd.f32 %v954, %v890
          %v987 = vadd.f32 %v955, %v891
          %v988 = vadd.f32 %v956, %v892
          %v989 = vadd.f32 %v957, %v893
          %v990 = vadd.f32 %v958, %v894
          %v991 = vadd.f32 %v959, %v895
          %v992 = vadd.f32 %v960, %v896
          %993 = vst [vmem:[%s320] sm:$0xff] %v961
          %994 = vst [vmem:[%s320 + $0x8] sm:$0xff] %v962
          %995 = vst [vmem:[%s320 + $0x10] sm:$0xff] %v963
          %996 = vst [vmem:[%s320 + $0x18] sm:$0xff] %v964
          %997 = vst [vmem:[%s320 + $0x20] sm:$0xff] %v965
          %998 = vst [vmem:[%s320 + $0x28] sm:$0xff] %v966
          %999 = vst [vmem:[%s320 + $0x30] sm:$0xff] %v967
          %1000 = vst [vmem:[%s320 + $0x38] sm:$0xff] %v968
          %1001 = vst [vmem:[%s320 + $0x40] sm:$0xff] %v969
          %1002 = vst [vmem:[%s320 + $0x48] sm:$0xff] %v970
          %1003 = vst [vmem:[%s320 + $0x50] sm:$0xff] %v971
          %1004 = vst [vmem:[%s320 + $0x58] sm:$0xff] %v972
          %1005 = vst [vmem:[%s320 + $0x60] sm:$0xff] %v973
          %1006 = vst [vmem:[%s320 + $0x68] sm:$0xff] %v974
          %1007 = vst [vmem:[%s320 + $0x70] sm:$0xff] %v975
          %1008 = vst [vmem:[%s320 + $0x78] sm:$0xff] %v976
          %1009 = vst [vmem:[%s320 + $0x80] sm:$0xff] %v977
          %1010 = vst [vmem:[%s320 + $0x88] sm:$0xff] %v978
          %1011 = vst [vmem:[%s320 + $0x90] sm:$0xff] %v979
          %1012 = vst [vmem:[%s320 + $0x98] sm:$0xff] %v980
          %1013 = vst [vmem:[%s320 + $0xa0] sm:$0xff] %v981
          %1014 = vst [vmem:[%s320 + $0xa8] sm:$0xff] %v982
          %1015 = vst [vmem:[%s320 + $0xb0] sm:$0xff] %v983
          %1016 = vst [vmem:[%s320 + $0xb8] sm:$0xff] %v984
          %1017 = vst [vmem:[%s320 + $0xc0] sm:$0xff] %v985
          %1018 = vst [vmem:[%s320 + $0xc8] sm:$0xff] %v986
          %1019 = vst [vmem:[%s320 + $0xd0] sm:$0xff] %v987
          %1020 = vst [vmem:[%s320 + $0xd8] sm:$0xff] %v988
          %1021 = vst [vmem:[%s320 + $0xe0] sm:$0xff] %v989
          %1022 = vst [vmem:[%s320 + $0xe8] sm:$0xff] %v990
          %1023 = vst [vmem:[%s320 + $0xf0] sm:$0xff] %v991
          %1024 = vst [vmem:[%s320 + $0xf8] sm:$0xff] %v992
        $region52: #{tpu_custom_call.1} parent=31 // pred_fallthru
          _
        %s1025 = sand.u32 %s128, 1
        %s1026 = scalar_lea.sflag [#allocation5], %s1025
        %s1027 = sand.u32 %s128, 1
        %s1028 = smul.addr %s1027, 256
        %s1029 = scalar_lea.vmem [#allocation9], %s1028
        %s1030 = sand.u32 %s154, 1
        %s1031 = scalar_lea.sflag [#allocation11], %s1030
        %s1032 = sand.u32 %s154, 1
        %s1033 = smul.addr %s1032, 256
        %s1034 = scalar_lea.vmem [#allocation10], %s1033
        // Predicated region
        $region53: #{tpu_custom_call.1} parent=31 // pred_check
          %p1035 = pneg %p138
        $region54: #{tpu_custom_call.1} parent=31 // pred_check_branch
          %1037 = sbr.rel (%p1035) target = $region56
        $region55: #{tpu_custom_call.1} parent=31 // pred_region
          %s1038 = smul.u32 32, %s32
          %s1040 = ssub.s32 4096, 4096
          %1041 = vsyncadd %s1026, %s1040
          %s1042 = smul.addr %s1038, 128
          %s1043 = scalar_lea.hbm %s3, %s1042
          %s1044 = sshll.u32 %s1029, 4
          %s1045 = int_to_ptr.vmem [resolvable:$true] %s1044
          %1050 = dma.vmem_to_hbm [thread:$0]  %s1045, 4096, %s1043, %s1026, 128, 128, 8
        $region56: #{tpu_custom_call.1} parent=31 // pred_fallthru
          _
        // Predicated region
        $region57: #{tpu_custom_call.1} parent=31 // pred_check
          %p1051 = pneg %p164
        $region58: #{tpu_custom_call.1} parent=31 // pred_check_branch
          %1053 = sbr.rel (%p1051) target = $region60
        $region59: #{tpu_custom_call.1} parent=31 // pred_region
          %s1054 = smul.u32 32, %s32
          %s1056 = ssub.s32 4096, 4096
          %1057 = vsyncadd %s1031, %s1056
          %s1058 = smul.addr %s1054, 128
          %s1059 = scalar_lea.hbm %s4, %s1058
          %s1060 = sshll.u32 %s1034, 4
          %s1061 = int_to_ptr.vmem [resolvable:$true] %s1060
          %1066 = dma.vmem_to_hbm [thread:$0]  %s1061, 4096, %s1059, %s1031, 128, 128, 8
        $region60: #{tpu_custom_call.1} parent=31 // pred_fallthru
          _
      $region32: #{tpu_custom_call.1} parent=5 // pred_fallthru
        _
      %p1067 = scmp.le.s32.totalorder 2, %s23
      // Predicated region
      $region61: #{tpu_custom_call.1} parent=5 // pred_check
        %p1068 = pneg %p1067
      $region62: #{tpu_custom_call.1} parent=5 // pred_check_branch
        %1070 = sbr.rel (%p1068) target = $region64
      $region63: #{tpu_custom_call.1} parent=5 // pred_region
        %s1071 = ssub.s32 %s23, 2
        // Predicated region
        $region65: #{tpu_custom_call.1} parent=63 // pred_check
          %p1072 = pneg %p144
        $region66: #{tpu_custom_call.1} parent=63 // pred_check_branch
          %1074 = sbr.rel (%p1072) target = $region68
        $region67: #{tpu_custom_call.1} parent=63 // pred_region
          %s1075 = sand.u32 %s129, 1
          %s1076 = scalar_lea.sflag [#allocation5], %s1075
          %s1077 = sand.u32 %s129, 1
          %s1078 = smul.addr %s1077, 256
          %s1079 = scalar_lea.vmem [#allocation9], %s1078
          %1080 = dma.done %s1076, 4096
        $region68: #{tpu_custom_call.1} parent=63 // pred_fallthru
          _
        // Predicated region
        $region69: #{tpu_custom_call.1} parent=63 // pred_check
          %p1081 = pneg %p170
        $region70: #{tpu_custom_call.1} parent=63 // pred_check_branch
          %1083 = sbr.rel (%p1081) target = $region72
        $region71: #{tpu_custom_call.1} parent=63 // pred_region
          %s1084 = sand.u32 %s155, 1
          %s1085 = scalar_lea.sflag [#allocation11], %s1084
          %s1086 = sand.u32 %s155, 1
          %s1087 = smul.addr %s1086, 256
          %s1088 = scalar_lea.vmem [#allocation10], %s1087
          %1089 = dma.done %s1085, 4096
        $region72: #{tpu_custom_call.1} parent=63 // pred_fallthru
          _
      $region64: #{tpu_custom_call.1} parent=5 // pred_fallthru
        _
    $region6: #{tpu_custom_call.1} parent=1 // loop_footer
      %s27 = sadd.s32 1, %s23
    $region7: #{tpu_custom_call.1} parent=1 // loop_footer_branch
      %22 = sbr.rel target = $region3
    $region8: #{tpu_custom_call.1} parent=1 // loop_exit
      _
    %1090 = vsyncpa [#allocation4], 1
    %s1091 = scalar_lea.sflag [#allocation4], 1
    %1092 = vsyncpa %s1091, 1
    %1093 = vsyncpa [#allocation7], 1
    %s1094 = scalar_lea.sflag [#allocation7], 1
    %1095 = vsyncpa %s1094, 1
    %1096 = vsyncpa [#allocation5], 1
    %s1097 = scalar_lea.sflag [#allocation5], 1
    %1098 = vsyncpa %s1097, 1
    %1099 = vsyncpa [#allocation11], 1
    %s1100 = scalar_lea.sflag [#allocation11], 1
    %1101 = vsyncpa %s1100, 1

</llo_original>
